<compile_context>
chip_gen: v5e
topology: v5e:2x2
jax: 0.10.0
libtpu: 0.0.40
codegen_flags: <defaults>
</compile_context>

<pallas_src>
import jax
import jax.numpy as jnp
import numpy as np
from jax.experimental import pallas as pl
from jax.experimental.pallas import tpu as pltpu


def attention_kernel(x_ref, w1_ref, b1_ref, w2_ref, b2_ref, proj_ref, fcb_ref,
                     o_ref, acc_ref):
    s_idx = pl.program_id(1)

    @pl.when(s_idx == 0)
    def _init():
        acc_ref[...] = jnp.zeros_like(acc_ref)

    Bt, St, H2 = x_ref.shape
    h3 = x_ref[...]                                   # (Bt, St, 2H) bf16
    # Free reshape: the wrapper guarantees St is sublane-aligned or == S.
    h = h3.reshape(Bt * St, H2)                       # fold batch into MXU M dim

    # Linear(2H -> D) + tanh: bf16 MXU matmul, f32 accumulate, EUP tanh.
    act = jnp.tanh(
        jnp.dot(h, w1_ref[...], preferred_element_type=jnp.float32) + b1_ref[...])
    # Linear(D -> A): bf16 MXU matmul, f32 accumulate.
    sc = jnp.dot(act.astype(jnp.bfloat16), w2_ref[...],
                 preferred_element_type=jnp.float32) + b2_ref[...]

    # Fused softmax(attn axis) + fc-weight projection.
    #   combined[r] = (sum_a exp(sc[r,a]-m) * fcw[a]) / (sum_a exp(sc[r,a]-m))
    # Both reductions come out of a single MXU matmul against proj
    # (col 0 = fcw, col 1 = ones, cols 2.. = 0) instead of two XLU lane reduces.
    m = jnp.max(sc, axis=-1, keepdims=True)
    e = jnp.exp(sc - m)                               # (Bt*St, A) f32
    nd = jnp.dot(e, proj_ref[...], preferred_element_type=jnp.float32)
    num = nd[:, 0:1]
    den = nd[:, 1:2]                                  # >= 1, approx recip is safe
    combined = num * pl.reciprocal(den, approx=True)  # (Bt*St, 1) f32

    # Partial weighted sum over this sequence tile:
    #   acc[b,:] += sum_s combined[b,s] * h[b,s,:]
    # NOTE: at very large Bt*St this could become an MXU contraction
    # (einsum 'bqs,bsh->bqh'); the broadcast form below keeps the reshape
    # relayout-free and the codegen path simple.
    w = combined.reshape(Bt, St, 1)                   # sublane-only regroup
    acc_ref[...] += jnp.sum(w * h3, axis=1)           # (Bt, 2H) f32

    @pl.when(s_idx == pl.num_programs(1) - 1)
    def _finalize():
        out = acc_ref[...] + fcb_ref[0, 0]            # fc bias (SMEM scalar)
        out = jnp.where(out > 0, out, 0.01 * out)     # LeakyReLU(0.01)
        o_ref[...] = out.astype(o_ref.dtype)          # dense (Bt, 2H) store


def attention_forward(x, w1, b1, w2, b2, fcw, fcb):
    """x: (B, S, 2H) float32. Returns (B, 2H) float32."""
    B, S, H2 = x.shape
    D = w1.shape[1]
    A = w2.shape[1]
    PROJ_N = 128                                       # lane-dense projection width

    # ---- generation-aware VMEM budget -------------------------------------
    try:
        vmem_bytes = int(pltpu.get_tpu_info().vmem_capacity_bytes)
    except Exception:
        vmem_bytes = 64 * 1024 * 1024                  # conservative (v7x-sized)
    vmem_limit = (vmem_bytes * 3) // 4                 # leave compiler headroom

    try:
        dev_kind = jax.devices()[0].device_kind.lower()
    except Exception:
        dev_kind = ""
    n_tc = 2 if "v7" in dev_kind else 1                # multi-TensorCore parts only

    bf16_bytes = 2
    # double-buffered weights/biases/projection (f32 biases, f32 proj)
    weight_vmem = 2 * (H2 * D * bf16_bytes + D * A * bf16_bytes
                       + A * PROJ_N * 4 + D * 4 + A * 4)
    slab_budget = max(vmem_limit - weight_vmem - (4 << 20), 4 << 20)

    def slab_bytes(bt, st):                            # double-buffered bf16 x tile
        return 2 * bt * st * H2 * bf16_bytes

    # Sequence tile: full S unless even one batch row per tile would blow the
    # budget; shrink only to sublane-aligned (bf16 -> 16) divisors of S so the
    # in-kernel flattening reshape stays layout-free.
    st_cands = [d for d in range(S, 0, -1) if S % d == 0 and (d == S or d % 16 == 0)]
    St = st_cands[-1]
    for d in st_cands:
        if slab_bytes(1, d) <= slab_budget:
            St = d
            break

    # Batch tile: largest divisor of B (== B, or a multiple of 8 so the 2D
    # output block stays sublane-dense) whose double-buffered slab fits VMEM.
    bt_cands = [d for d in range(B, 0, -1) if B % d == 0 and (d == B or d % 8 == 0)]
    fits = [d for d in bt_cands if slab_bytes(d, St) <= slab_budget] or [bt_cands[-1]]
    Bt = fits[0]
    if n_tc > 1:
        # On multi-TC chips prefer >= n_tc parallel batch tiles, but only if
        # each tile still feeds the MXU with >= 256 rows.
        for d in fits:
            if B // d >= n_tc and d * St >= 256:
                Bt = d
                break
    grid_b = B // Bt
    grid_s = S // St

    # ---- operand preparation ----------------------------------------------
    xb = x.astype(jnp.bfloat16)                        # bf16 MXU path, half the DMA
    w1b = w1.astype(jnp.bfloat16)
    w2b = w2.astype(jnp.bfloat16)
    b1_2d = b1.reshape(1, D).astype(jnp.float32)
    b2_2d = b2.reshape(1, A).astype(jnp.float32)
    proj = jnp.zeros((A, PROJ_N), jnp.float32)
    proj = proj.at[:, 0].set(fcw.astype(jnp.float32))  # fc weight column
    proj = proj.at[:, 1].set(1.0)                      # softmax-denominator column
    fcb_2d = fcb.reshape(1, 1).astype(jnp.float32)

    out = pl.pallas_call(
        attention_kernel,
        out_shape=jax.ShapeDtypeStruct((B, H2), jnp.float32),
        grid_spec=pltpu.PrefetchScalarGridSpec(
            num_scalar_prefetch=0,
            grid=(grid_b, grid_s),
            in_specs=[
                pl.BlockSpec((Bt, St, H2), lambda b, s: (b, s, 0)),   # x tile
                pl.BlockSpec((H2, D), lambda b, s: (0, 0)),           # W1 (bf16)
                pl.BlockSpec((1, D), lambda b, s: (0, 0)),            # b1
                pl.BlockSpec((D, A), lambda b, s: (0, 0)),            # W2 (bf16)
                pl.BlockSpec((1, A), lambda b, s: (0, 0)),            # b2
                pl.BlockSpec((A, PROJ_N), lambda b, s: (0, 0)),       # [fcw | ones]
                pl.BlockSpec(memory_space=pltpu.MemorySpace.SMEM),    # fc bias scalar
            ],
            out_specs=pl.BlockSpec((Bt, H2), lambda b, s: (b, 0)),    # dense 2D out
            scratch_shapes=[pltpu.VMEM((Bt, H2), jnp.float32)],       # S accumulator
        ),
        compiler_params=pltpu.CompilerParams(
            dimension_semantics=("parallel", "arbitrary"),
            vmem_limit_bytes=int(vmem_limit),
        ),
    )(xb, w1b, b1_2d, w2b, b2_2d, proj, fcb_2d)
    return out


def attention_reference(x, w1, b1, w2, b2, fcw, fcb):
    """Pure-JAX f32 reference mirroring the PyTorch forward exactly."""
    h = x                                                       # cat(fw, bw) == x
    act = jnp.tanh(h @ w1 + b1)                                 # (B, S, D)
    sc = act @ w2 + b2                                          # (B, S, A)
    aw = jax.nn.softmax(sc, axis=2)                             # (B, S, A)
    av = jnp.einsum("bsa,bsh->bah", aw, h)                      # (B, A, 2H)
    out = jnp.einsum("bah,a->bh", av, fcw) + fcb[0]             # (B, 2H)
    return jnp.where(out > 0, out, 0.01 * out)


if __name__ == "__main__":
    # Small shapes consistent with the module: hidden_dim=64 -> features 2H=128,
    # output_dim=256, attn_dim=128, batch=2, seq=8.
    B, S = 2, 8
    hidden_dim = 64
    H2 = 2 * hidden_dim
    output_dim = 256
    attn_dim = 128

    key = jax.random.PRNGKey(0)
    kx, k1, k2, k3, k4, k5, k6 = jax.random.split(key, 7)

    x = jax.random.normal(kx, (B, S, H2), dtype=jnp.float32)

    # Deterministic synthetic parameters (stored as (in, out) so y = x @ W + b).
    w1 = jax.random.normal(k1, (H2, output_dim), dtype=jnp.float32) * 0.05
    b1 = jax.random.normal(k2, (output_dim,), dtype=jnp.float32) * 0.05
    w2 = jax.random.normal(k3, (output_dim, attn_dim), dtype=jnp.float32) * 0.05
    b2 = jax.random.normal(k4, (attn_dim,), dtype=jnp.float32) * 0.05
    fcw = jax.random.normal(k5, (attn_dim,), dtype=jnp.float32) * 0.05
    fcb = jax.random.normal(k6, (1,), dtype=jnp.float32) * 0.05

    out = attention_forward(x, w1, b1, w2, b2, fcw, fcb)
    out = jax.block_until_ready(out)

    ref = attention_reference(x, w1, b1, w2, b2, fcw, fcb)
    assert out.shape == (B, H2)
    # Tolerance accounts for bf16 MXU operands (x, W1, W2) with f32 accumulation
    # and the EUP approx reciprocal in the softmax denominator.
    np.testing.assert_allclose(np.asarray(out), np.asarray(ref), rtol=2e-2, atol=5e-3)

    print("KERNEL_OK")
</pallas_src>

<mosaic_0001>
module attributes {stable_mosaic.version = 11 : i64} {
  func.func @attention_kernel(%arg0: i32, %arg1: i32, %arg2: memref<2x8x128xbf16, #tpu.memory_space<vmem>>, %arg3: memref<128x256xbf16, #tpu.memory_space<vmem>>, %arg4: memref<1x256xf32, #tpu.memory_space<vmem>>, %arg5: memref<256x128xbf16, #tpu.memory_space<vmem>>, %arg6: memref<1x128xf32, #tpu.memory_space<vmem>>, %arg7: memref<128x128xf32, #tpu.memory_space<vmem>>, %arg8: memref<1x1xf32, #tpu.memory_space<smem>>, %arg9: memref<2x128xf32, #tpu.memory_space<vmem>>, %arg10: memref<2x128xf32, #tpu.memory_space<vmem>>) attributes {dimension_semantics = [#tpu.dimension_semantics<parallel>, #tpu.dimension_semantics<arbitrary>], iteration_bounds = array<i64: 1, 1>, scalar_prefetch = 0 : i64, scratch_operands = 1 : i64, tpu.core_type = #tpu.core_type<tc>, window_params = [{transform_indices = @transform_0, window_bounds = array<i64: 2, 8, 128>}, {pipeline_mode = #tpu.pipeline_mode<synchronous>, transform_indices = @transform_1, window_bounds = array<i64: 128, 256>}, {pipeline_mode = #tpu.pipeline_mode<synchronous>, transform_indices = @transform_2, window_bounds = array<i64: 1, 256>}, {pipeline_mode = #tpu.pipeline_mode<synchronous>, transform_indices = @transform_3, window_bounds = array<i64: 256, 128>}, {pipeline_mode = #tpu.pipeline_mode<synchronous>, transform_indices = @transform_4, window_bounds = array<i64: 1, 128>}, {pipeline_mode = #tpu.pipeline_mode<synchronous>, transform_indices = @transform_5, window_bounds = array<i64: 128, 128>}, {transform_indices = @transform_6, window_bounds = array<i64: 1, 1>}, {transform_indices = @transform_7, window_bounds = array<i64: 2, 128>}]} {
    %c0_i32 = arith.constant 0 : i32
    %0 = arith.cmpi eq, %arg1, %c0_i32 : i32
    %1 = arith.extui %0 : i1 to i32
    %c0_i32_0 = arith.constant 0 : i32
    %2 = arith.cmpi ne, %1, %c0_i32_0 : i32
    scf.if %2 {
      %cst_23 = arith.constant 0.000000e+00 : f32
      %39 = vector.broadcast %cst_23 : f32 to vector<2x128xf32>
      %c0_24 = arith.constant 0 : index
      %c0_25 = arith.constant 0 : index
      %40 = vector.load %arg10[%c0_24, %c0_25] : memref<2x128xf32, #tpu.memory_space<vmem>>, vector<2x128xf32>
      tpu.vector_store %arg10[%c0_24, %c0_25], %39 {strides = array<i32>} : memref<2x128xf32, #tpu.memory_space<vmem>>, vector<2x128xf32>,
    } else {
    }
    %c0 = arith.constant 0 : index
    %c0_1 = arith.constant 0 : index
    %c0_2 = arith.constant 0 : index
    %3 = vector.load %arg2[%c0, %c0_1, %c0_2] : memref<2x8x128xbf16, #tpu.memory_space<vmem>>, vector<2x8x128xbf16>
    %4 = vector.shape_cast %3 : vector<2x8x128xbf16> to vector<16x128xbf16>
    %c0_3 = arith.constant 0 : index
    %c0_4 = arith.constant 0 : index
    %5 = vector.load %arg3[%c0_3, %c0_4] : memref<128x256xbf16, #tpu.memory_space<vmem>>, vector<128x256xbf16>
    %cst = arith.constant dense<0.000000e+00> : vector<16x256xf32>
    %6 = tpu.matmul %4, %5, %cst {dimension_numbers = #tpu.dot_dimension_numbers<[1], [0], [0], [1], [0, 0, 1, 1], [], []>} : vector<16x128xbf16>, vector<128x256xbf16>, vector<16x256xf32> -> vector<16x256xf32>
    %c0_5 = arith.constant 0 : index
    %c0_6 = arith.constant 0 : index
    %7 = vector.load %arg4[%c0_5, %c0_6] : memref<1x256xf32, #tpu.memory_space<vmem>>, vector<1x256xf32>
    %8 = vector.broadcast %7 : vector<1x256xf32> to vector<16x256xf32>
    %9 = arith.addf %6, %8 : vector<16x256xf32>
    %10 = math.tanh %9 : vector<16x256xf32>
    %11 = arith.truncf %10 : vector<16x256xf32> to vector<16x256xbf16>
    %c0_7 = arith.constant 0 : index
    %c0_8 = arith.constant 0 : index
    %12 = vector.load %arg5[%c0_7, %c0_8] : memref<256x128xbf16, #tpu.memory_space<vmem>>, vector<256x128xbf16>
    %cst_9 = arith.constant dense<0.000000e+00> : vector<16x128xf32>
    %13 = tpu.matmul %11, %12, %cst_9 {dimension_numbers = #tpu.dot_dimension_numbers<[1], [0], [0], [1], [0, 0, 1, 1], [], []>} : vector<16x256xbf16>, vector<256x128xbf16>, vector<16x128xf32> -> vector<16x128xf32>
    %c0_10 = arith.constant 0 : index
    %c0_11 = arith.constant 0 : index
    %14 = vector.load %arg6[%c0_10, %c0_11] : memref<1x128xf32, #tpu.memory_space<vmem>>, vector<1x128xf32>
    %15 = vector.broadcast %14 : vector<1x128xf32> to vector<16x128xf32>
    %16 = arith.addf %13, %15 : vector<16x128xf32>
    %cst_12 = arith.constant dense<0xFF800000> : vector<16xf32>
    %17 = vector.multi_reduction <maximumf>, %16, %cst_12 [1] : vector<16x128xf32> to vector<16xf32>
    %18 = vector.shape_cast %17 : vector<16xf32> to vector<16x1xf32>
    %19 = vector.broadcast %18 : vector<16x1xf32> to vector<16x128xf32>
    %20 = arith.subf %16, %19 : vector<16x128xf32>
    %21 = math.exp %20 : vector<16x128xf32>
    %c0_13 = arith.constant 0 : index
    %c0_14 = arith.constant 0 : index
    %22 = vector.load %arg7[%c0_13, %c0_14] : memref<128x128xf32, #tpu.memory_space<vmem>>, vector<128x128xf32>
    %cst_15 = arith.constant dense<0.000000e+00> : vector<16x128xf32>
    %23 = tpu.matmul %21, %22, %cst_15 {dimension_numbers = #tpu.dot_dimension_numbers<[1], [0], [0], [1], [0, 0, 1, 1], [], []>} : vector<16x128xf32>, vector<128x128xf32>, vector<16x128xf32> -> vector<16x128xf32>
    %24 = vector.extract_strided_slice %23 {offsets = [0, 0], sizes = [16, 1], strides = [1, 1]} : vector<16x128xf32> to vector<16x1xf32>
    %25 = vector.extract_strided_slice %23 {offsets = [0, 1], sizes = [16, 1], strides = [1, 1]} : vector<16x128xf32> to vector<16x1xf32>
    %26 = tpu.reciprocal %25 {approx = true} : vector<16x1xf32> -> vector<16x1xf32>
    %27 = arith.mulf %24, %26 : vector<16x1xf32>
    %28 = vector.shape_cast %27 : vector<16x1xf32> to vector<2x8x1xf32>
    %c0_16 = arith.constant 0 : index
    %c0_17 = arith.constant 0 : index
    %29 = vector.load %arg10[%c0_16, %c0_17] : memref<2x128xf32, #tpu.memory_space<vmem>>, vector<2x128xf32>
    %30 = arith.extf %3 : vector<2x8x128xbf16> to vector<2x8x128xf32>
    %31 = vector.broadcast %28 : vector<2x8x1xf32> to vector<2x8x128xf32>
    %32 = arith.mulf %31, %30 : vector<2x8x128xf32>
    %cst_18 = arith.constant dense<0.000000e+00> : vector<2x128xf32>
    %33 = vector.multi_reduction <add>, %32, %cst_18 [1] : vector<2x8x128xf32> to vector<2x128xf32>
    %34 = arith.addf %29, %33 : vector<2x128xf32>
    %c0_19 = arith.constant 0 : index
    %c0_20 = arith.constant 0 : index
    %35 = vector.load %arg10[%c0_19, %c0_20] : memref<2x128xf32, #tpu.memory_space<vmem>>, vector<2x128xf32>
    tpu.vector_store %arg10[%c0_19, %c0_20], %34 {strides = array<i32>} : memref<2x128xf32, #tpu.memory_space<vmem>>, vector<2x128xf32>,
    %c0_i32_21 = arith.constant 0 : i32
    %36 = arith.cmpi eq, %arg1, %c0_i32_21 : i32
    %37 = arith.extui %36 : i1 to i32
    %c0_i32_22 = arith.constant 0 : i32
    %38 = arith.cmpi ne, %37, %c0_i32_22 : i32
    scf.if %38 {
      %c0_23 = arith.constant 0 : index
      %c0_24 = arith.constant 0 : index
      %39 = vector.load %arg10[%c0_23, %c0_24] : memref<2x128xf32, #tpu.memory_space<vmem>>, vector<2x128xf32>
      %c0_25 = arith.constant 0 : index
      %c0_26 = arith.constant 0 : index
      %40 = memref.load %arg8[%c0_25, %c0_26] : memref<1x1xf32, #tpu.memory_space<smem>>
      %41 = vector.broadcast %40 : f32 to vector<2x128xf32>
      %42 = arith.addf %39, %41 : vector<2x128xf32>
      %cst_27 = arith.constant 0.000000e+00 : f32
      %43 = vector.broadcast %cst_27 : f32 to vector<2x128xf32>
      %44 = arith.cmpf ogt, %42, %43 : vector<2x128xf32>
      %cst_28 = arith.constant 0.00999999977 : f32
      %45 = vector.broadcast %cst_28 : f32 to vector<2x128xf32>
      %46 = arith.mulf %45, %42 : vector<2x128xf32>
      %47 = arith.select %44, %42, %46 : vector<2x128xi1>, vector<2x128xf32>
      %c0_29 = arith.constant 0 : index
      %c0_30 = arith.constant 0 : index
      %48 = vector.load %arg9[%c0_29, %c0_30] : memref<2x128xf32, #tpu.memory_space<vmem>>, vector<2x128xf32>
      tpu.vector_store %arg9[%c0_29, %c0_30], %47 {strides = array<i32>} : memref<2x128xf32, #tpu.memory_space<vmem>>, vector<2x128xf32>,
    } else {
    }
    return
  }
  func.func @transform_0(%arg0: i32, %arg1: i32) -> (i32, i32, i32) {
    %c0_i32 = arith.constant 0 : i32
    %c0_i32_0 = arith.constant 0 : i32
    return %arg0, %arg1, %c0_i32 : i32, i32, i32
  }
  func.func @transform_1(%arg0: i32, %arg1: i32) -> (i32, i32) {
    %c0_i32 = arith.constant 0 : i32
    %c0_i32_0 = arith.constant 0 : i32
    %c0_i32_1 = arith.constant 0 : i32
    return %c0_i32, %c0_i32_0 : i32, i32
  }
  func.func @transform_2(%arg0: i32, %arg1: i32) -> (i32, i32) {
    %c0_i32 = arith.constant 0 : i32
    %c0_i32_0 = arith.constant 0 : i32
    %c0_i32_1 = arith.constant 0 : i32
    return %c0_i32, %c0_i32_0 : i32, i32
  }
  func.func @transform_3(%arg0: i32, %arg1: i32) -> (i32, i32) {
    %c0_i32 = arith.constant 0 : i32
    %c0_i32_0 = arith.constant 0 : i32
    %c0_i32_1 = arith.constant 0 : i32
    return %c0_i32, %c0_i32_0 : i32, i32
  }
  func.func @transform_4(%arg0: i32, %arg1: i32) -> (i32, i32) {
    %c0_i32 = arith.constant 0 : i32
    %c0_i32_0 = arith.constant 0 : i32
    %c0_i32_1 = arith.constant 0 : i32
    return %c0_i32, %c0_i32_0 : i32, i32
  }
  func.func @transform_5(%arg0: i32, %arg1: i32) -> (i32, i32) {
    %c0_i32 = arith.constant 0 : i32
    %c0_i32_0 = arith.constant 0 : i32
    %c0_i32_1 = arith.constant 0 : i32
    return %c0_i32, %c0_i32_0 : i32, i32
  }
  func.func @transform_6(%arg0: i32, %arg1: i32) -> (i32, i32) {
    %c0_i32 = arith.constant 0 : i32
    %c0_i32_0 = arith.constant 0 : i32
    %c0_i32_1 = arith.constant 0 : i32
    return %c0_i32, %c0_i32_0 : i32, i32
  }
  func.func @transform_7(%arg0: i32, %arg1: i32) -> (i32, i32) {
    %c0_i32 = arith.constant 0 : i32
    %c0_i32_0 = arith.constant 0 : i32
    return %arg0, %c0_i32 : i32, i32
  }
}

</mosaic_0001>

<llo_original>
// kernel: tpu_custom_call.1
$region0: #{tpu_custom_call.1}
  #allocation0 [shape = 'u32[]', space=smem, size = 0x4, offset = 0x4, fixed_abs, tag = 'smem constant byte address 0x4 - core index']
  #allocation1 [shape = 'u32[72,128]{1,0:T(1,128)}', space=vmem, size = 0x9000, scoped, tag = 'internal scratch']
  #allocation2 [shape = 'f32[2,128]{1,0:T(2,128)}', space=vmem, size = 0x400, scoped, tag = 'scratch operand']
  #allocation3 [shape = 'f32[1,1]{1,0:T(1,128)S(6)}', space=smem, size = 0x200, scoped, tag = 'scoped memory for tpu_custom_call.1']
  %s0 = inlined_call_operand.hbm [shape: bf16[2,8,128], index: 0, kind: input, shape index: {}]
  %s1 = inlined_call_operand.hbm [shape: bf16[128,256], index: 1, kind: input, shape index: {}]
  %s2 = inlined_call_operand.vmem [shape: f32[1,256], index: 2, kind: input, shape index: {}]
  %s3 = inlined_call_operand.hbm [shape: bf16[256,128], index: 3, kind: input, shape index: {}]
  %s4 = inlined_call_operand.vmem [shape: f32[1,128], index: 4, kind: input, shape index: {}]
  %s5 = inlined_call_operand.hbm [shape: f32[128,128], index: 5, kind: input, shape index: {}]
  %s6 = inlined_call_operand.<no memory space> [shape: f32[1,1], index: 6, kind: input, shape index: {}]
  %s7 = inlined_call_operand.hbm [shape: f32[2,128], index: 7, kind: output, shape index: {}]
  %s8 = sld [smem:[#allocation0]]
  $region62: #{tpu_custom_call.1} parent=0
    _
  %s10 = ssub.s32 1, %s8
  %s11 = scalar_select 0, %s10, %s8
  %12 = sst [smem:[#allocation3]] %s6
  $region1: #{tpu_custom_call.1} parent=0
    #allocation4 [shape = 'u8[4096]{0}', space=vmem, size = 0x1000, scoped, tag = 'input window, operand 0, single buffered']
    #allocation5 [shape = 's32[1]{0}', space=sflag, size = 0x4, scoped, tag = 'scoped memory for tpu_custom_call.1']
    #allocation6 [shape = 's32[1]{0}', space=sflag, size = 0x4, scoped, tag = 'scoped memory for tpu_custom_call.1']
    #allocation7 [shape = 'u8[65536]{0}', space=vmem, size = 0x10000, scoped, tag = 'input window, operand 1, single buffered']
    #allocation8 [shape = 's32[1]{0}', space=sflag, size = 0x4, scoped, tag = 'scoped memory for tpu_custom_call.1']
    #allocation9 [shape = 'u8[65536]{0}', space=vmem, size = 0x10000, scoped, tag = 'input window, operand 3, single buffered']
    #allocation10 [shape = 'u8[65536]{0}', space=vmem, size = 0x10000, scoped, tag = 'input window, operand 5, single buffered']
    #allocation11 [shape = 's32[1]{0}', space=sflag, size = 0x4, scoped, tag = 'scoped memory for tpu_custom_call.1']
    #allocation12 [shape = 'u8[1024]{0}', space=vmem, size = 0x400, scoped, tag = 'output window, operand 0, single buffered']
    %13 = vsyncpa [#allocation5], 0
    %14 = vsyncpa [#allocation8], 0
    %15 = vsyncpa [#allocation11], 0
    %16 = vsyncpa [#allocation6], 0
    // Predicated region
    $region2: #{tpu_custom_call.1} parent=1 // pred_check
      _
    $region3: #{tpu_custom_call.1} parent=1 // pred_check_branch
      %18 = sbr.rel (0) target = $region5
    $region4: #{tpu_custom_call.1} parent=1 // pred_region
      %20 = vsyncadd [#allocation5], 0
      %s21 = sshll.u32 %s0, 4
      %s22 = int_to_ptr.hbm [resolvable:$true] %s21
      %s23 = sshll.u32 [#allocation4], 4
      %s24 = int_to_ptr.vmem [resolvable:$true] %s23
      %29 = dma.hbm_to_vmem [thread:$0]  %s22, 128, %s24, [#allocation5], 64, 64, 4
    $region5: #{tpu_custom_call.1} parent=1 // pred_fallthru
      _
    // Predicated region
    $region6: #{tpu_custom_call.1} parent=1 // pred_check
      _
    $region7: #{tpu_custom_call.1} parent=1 // pred_check_branch
      %31 = sbr.rel (0) target = $region9
    $region8: #{tpu_custom_call.1} parent=1 // pred_region
      %33 = vsyncadd [#allocation8], 0
      %s34 = sshll.u32 %s1, 4
      %s35 = int_to_ptr.hbm [resolvable:$true] %s34
      %s36 = sshll.u32 [#allocation7], 4
      %s37 = int_to_ptr.vmem [resolvable:$true] %s36
      %42 = dma.hbm_to_vmem [thread:$0]  %s35, 2048, %s37, [#allocation8], 128, 128, 8
    $region9: #{tpu_custom_call.1} parent=1 // pred_fallthru
      _
    // Predicated region
    $region10: #{tpu_custom_call.1} parent=1 // pred_check
      _
    $region11: #{tpu_custom_call.1} parent=1 // pred_check_branch
      %44 = sbr.rel (0) target = $region13
    $region12: #{tpu_custom_call.1} parent=1 // pred_region
      _
    $region13: #{tpu_custom_call.1} parent=1 // pred_fallthru
      _
    // Predicated region
    $region14: #{tpu_custom_call.1} parent=1 // pred_check
      _
    $region15: #{tpu_custom_call.1} parent=1 // pred_check_branch
      %46 = sbr.rel (0) target = $region17
    $region16: #{tpu_custom_call.1} parent=1 // pred_region
      %48 = vsyncadd [#allocation8], 0
      %s49 = sshll.u32 %s3, 4
      %s50 = int_to_ptr.hbm [resolvable:$true] %s49
      %s51 = sshll.u32 [#allocation9], 4
      %s52 = int_to_ptr.vmem [resolvable:$true] %s51
      %57 = dma.hbm_to_vmem [thread:$0]  %s50, 2048, %s52, [#allocation8], 64, 64, 4
    $region17: #{tpu_custom_call.1} parent=1 // pred_fallthru
      _
    // Predicated region
    $region18: #{tpu_custom_call.1} parent=1 // pred_check
      _
    $region19: #{tpu_custom_call.1} parent=1 // pred_check_branch
      %59 = sbr.rel (0) target = $region21
    $region20: #{tpu_custom_call.1} parent=1 // pred_region
      _
    $region21: #{tpu_custom_call.1} parent=1 // pred_fallthru
      _
    // Predicated region
    $region22: #{tpu_custom_call.1} parent=1 // pred_check
      _
    $region23: #{tpu_custom_call.1} parent=1 // pred_check_branch
      %61 = sbr.rel (0) target = $region25
    $region24: #{tpu_custom_call.1} parent=1 // pred_region
      %63 = vsyncadd [#allocation11], 0
      %s64 = sshll.u32 %s5, 4
      %s65 = int_to_ptr.hbm [resolvable:$true] %s64
      %s66 = sshll.u32 [#allocation10], 4
      %s67 = int_to_ptr.vmem [resolvable:$true] %s66
      %72 = dma.hbm_to_vmem [thread:$0]  %s65, 2048, %s67, [#allocation11], 128, 128, 8
    $region25: #{tpu_custom_call.1} parent=1 // pred_fallthru
      _
    // Predicated region
    $region26: #{tpu_custom_call.1} parent=1 // pred_check
      _
    $region27: #{tpu_custom_call.1} parent=1 // pred_check_branch
      %74 = sbr.rel (0) target = $region29
    $region28: #{tpu_custom_call.1} parent=1 // pred_region
      _
    $region29: #{tpu_custom_call.1} parent=1 // pred_fallthru
      _
    // Predicated region
    $region30: #{tpu_custom_call.1} parent=1 // pred_check
      _
    $region31: #{tpu_custom_call.1} parent=1 // pred_check_branch
      %76 = sbr.rel (0) target = $region33
    $region32: #{tpu_custom_call.1} parent=1 // pred_region
      %78 = dma.done [#allocation5], 128
    $region33: #{tpu_custom_call.1} parent=1 // pred_fallthru
      _
    // Predicated region
    $region34: #{tpu_custom_call.1} parent=1 // pred_check
      _
    $region35: #{tpu_custom_call.1} parent=1 // pred_check_branch
      %80 = sbr.rel (0) target = $region37
    $region36: #{tpu_custom_call.1} parent=1 // pred_region
      %82 = dma.done [#allocation8], 2048
    $region37: #{tpu_custom_call.1} parent=1 // pred_fallthru
      _
    // Predicated region
    $region38: #{tpu_custom_call.1} parent=1 // pred_check
      _
    $region39: #{tpu_custom_call.1} parent=1 // pred_check_branch
      %84 = sbr.rel (0) target = $region41
    $region40: #{tpu_custom_call.1} parent=1 // pred_region
      %86 = dma.done [#allocation8], 2048
    $region41: #{tpu_custom_call.1} parent=1 // pred_fallthru
      _
    // Predicated region
    $region42: #{tpu_custom_call.1} parent=1 // pred_check
      _
    $region43: #{tpu_custom_call.1} parent=1 // pred_check_branch
      %88 = sbr.rel (0) target = $region45
    $region44: #{tpu_custom_call.1} parent=1 // pred_region
      %90 = dma.done [#allocation11], 2048
    $region45: #{tpu_custom_call.1} parent=1 // pred_fallthru
      _
    %p91 = scmp.eq.s32.totalorder 0, 0
    // Predicated region
    $region46: #{tpu_custom_call.1} parent=1 // pred_check
      %p92 = pneg %p91
    $region47: #{tpu_custom_call.1} parent=1 // pred_check_branch
      %94 = sbr.rel (%p92) target = $region49
    $region48: #{tpu_custom_call.1} parent=1 // pred_region
      %95 = vst [vmem:[#allocation2] sm:$0x3] 0.0
    $region49: #{tpu_custom_call.1} parent=1 // pred_fallthru
      _
    %v96 = vld [vmem:[#allocation4] sm:$0xf]
    %v97 = vld [vmem:[#allocation4 + $0x4] sm:$0xf]
    %v98 = vld [vmem:[#allocation7] sm:$0xff]
    %v99 = vld [vmem:[#allocation7 + $0x8] sm:$0xff]
    %v100 = vld [vmem:[#allocation7 + $0x10] sm:$0xff]
    %v101 = vld [vmem:[#allocation7 + $0x18] sm:$0xff]
    %v102 = vld [vmem:[#allocation7 + $0x20] sm:$0xff]
    %v103 = vld [vmem:[#allocation7 + $0x28] sm:$0xff]
    %v104 = vld [vmem:[#allocation7 + $0x30] sm:$0xff]
    %v105 = vld [vmem:[#allocation7 + $0x38] sm:$0xff]
    %v106 = vld [vmem:[#allocation7 + $0x40] sm:$0xff]
    %v107 = vld [vmem:[#allocation7 + $0x48] sm:$0xff]
    %v108 = vld [vmem:[#allocation7 + $0x50] sm:$0xff]
    %v109 = vld [vmem:[#allocation7 + $0x58] sm:$0xff]
    %v110 = vld [vmem:[#allocation7 + $0x60] sm:$0xff]
    %v111 = vld [vmem:[#allocation7 + $0x68] sm:$0xff]
    %v112 = vld [vmem:[#allocation7 + $0x70] sm:$0xff]
    %v113 = vld [vmem:[#allocation7 + $0x78] sm:$0xff]
    %v114 = vld [vmem:[%s2] sm:$0x3]
    %v116 = vperm.slane %v114, 0
    %v117 = vperm.slane %v114, 1
    %v122 = vunpack.c.l.b16 %v96
    %v123 = vunpack.c.l.b16 %v97
    %v124 = vpack.c.b16 %v123, %v122
    %v142 = vunpack.c.l.b16 %v98
    %v143 = vunpack.c.h.b16 %v98
    %v144 = vunpack.c.l.b16 %v99
    %v145 = vunpack.c.h.b16 %v99
    %v146 = vunpack.c.l.b16 %v100
    %v147 = vunpack.c.h.b16 %v100
    %v148 = vunpack.c.l.b16 %v101
    %v149 = vunpack.c.h.b16 %v101
    %v150 = vunpack.c.l.b16 %v102
    %v151 = vunpack.c.h.b16 %v102
    %v152 = vunpack.c.l.b16 %v103
    %v153 = vunpack.c.h.b16 %v103
    %v154 = vunpack.c.l.b16 %v104
    %v155 = vunpack.c.h.b16 %v104
    %v156 = vunpack.c.l.b16 %v105
    %v157 = vunpack.c.h.b16 %v105
    %v158 = vunpack.c.l.b16 %v106
    %v159 = vunpack.c.h.b16 %v106
    %v160 = vunpack.c.l.b16 %v107
    %v161 = vunpack.c.h.b16 %v107
    %v162 = vunpack.c.l.b16 %v108
    %v163 = vunpack.c.h.b16 %v108
    %v164 = vunpack.c.l.b16 %v109
    %v165 = vunpack.c.h.b16 %v109
    %v166 = vunpack.c.l.b16 %v110
    %v167 = vunpack.c.h.b16 %v110
    %v168 = vunpack.c.l.b16 %v111
    %v169 = vunpack.c.h.b16 %v111
    %v170 = vunpack.c.l.b16 %v112
    %v171 = vunpack.c.h.b16 %v112
    %v172 = vunpack.c.l.b16 %v113
    %v173 = vunpack.c.h.b16 %v113
    %v174 = vpack.c.b16 %v144, %v142
    %v175 = vpack.c.b16 %v145, %v143
    %v176 = vpack.c.b16 %v148, %v146
    %v177 = vpack.c.b16 %v149, %v147
    %v178 = vpack.c.b16 %v152, %v150
    %v179 = vpack.c.b16 %v153, %v151
    %v180 = vpack.c.b16 %v156, %v154
    %v181 = vpack.c.b16 %v157, %v155
    %v182 = vpack.c.b16 %v160, %v158
    %v183 = vpack.c.b16 %v161, %v159
    %v184 = vpack.c.b16 %v164, %v162
    %v185 = vpack.c.b16 %v165, %v163
    %v186 = vpack.c.b16 %v168, %v166
    %v187 = vpack.c.b16 %v169, %v167
    %v188 = vpack.c.b16 %v172, %v170
    %v189 = vpack.c.b16 %v173, %v171
    %206 = vmatpush.bf16.msra.mxu0 %v188
    %207 = vmatpush.bf16.msra.mxu0 %v186
    %208 = vmatpush.bf16.msra.mxu0 %v184
    %209 = vmatpush.bf16.msra.mxu0 %v182
    %210 = vmatpush.bf16.msra.mxu0 %v180
    %211 = vmatpush.bf16.msra.mxu0 %v178
    %212 = vmatpush.bf16.msra.mxu0 %v176
    %213 = vmatpush.bf16.msra.mxu0 %v174
    %214 = vmatmul.bf16.gmra.mxu0 %v124
    %v215 = vpop.f32.mrf.mxu0
    %v216 = vadd.f32 %v116, %v215
    %v217 = vpop.f32.mrf.mxu0
    %v218 = vadd.f32 %v116, %v217
    %219 = vdwg.mxu0
    %220 = vmatpush.bf16.msra.mxu0 %v189
    %221 = vmatpush.bf16.msra.mxu0 %v187
    %222 = vmatpush.bf16.msra.mxu0 %v185
    %223 = vmatpush.bf16.msra.mxu0 %v183
    %224 = vmatpush.bf16.msra.mxu0 %v181
    %225 = vmatpush.bf16.msra.mxu0 %v179
    %226 = vmatpush.bf16.msra.mxu0 %v177
    %227 = vmatpush.bf16.msra.mxu0 %v175
    %228 = vmatmul.bf16.gmra.mxu0 %v124
    %v229 = vpop.f32.mrf.mxu0
    %v230 = vadd.f32 %v117, %v229
    %v231 = vpop.f32.mrf.mxu0
    %v232 = vadd.f32 %v117, %v231
    %233 = vdwg.mxu0
    %v234 = vtanh.pop %v216
    %v235 = vtanh.pop %v230
    %v236 = vtanh.pop %v218
    %v237 = vtanh.pop %v232
    %v238 = vpack.c.bf16 %v236, %v234
    %v239 = vpack.c.bf16 %v237, %v235
    %v240 = vld [vmem:[#allocation9] sm:$0xf]
    %v241 = vld [vmem:[#allocation9 + $0x4] sm:$0xf]
    %v242 = vld [vmem:[#allocation9 + $0x8] sm:$0xf]
    %v243 = vld [vmem:[#allocation9 + $0xc] sm:$0xf]
    %v244 = vld [vmem:[#allocation9 + $0x10] sm:$0xf]
    %v245 = vld [vmem:[#allocation9 + $0x14] sm:$0xf]
    %v246 = vld [vmem:[#allocation9 + $0x18] sm:$0xf]
    %v247 = vld [vmem:[#allocation9 + $0x1c] sm:$0xf]
    %v248 = vld [vmem:[#allocation9 + $0x20] sm:$0xf]
    %v249 = vld [vmem:[#allocation9 + $0x24] sm:$0xf]
    %v250 = vld [vmem:[#allocation9 + $0x28] sm:$0xf]
    %v251 = vld [vmem:[#allocation9 + $0x2c] sm:$0xf]
    %v252 = vld [vmem:[#allocation9 + $0x30] sm:$0xf]
    %v253 = vld [vmem:[#allocation9 + $0x34] sm:$0xf]
    %v254 = vld [vmem:[#allocation9 + $0x38] sm:$0xf]
    %v255 = vld [vmem:[#allocation9 + $0x3c] sm:$0xf]
    %v256 = vld [vmem:[#allocation9 + $0x40] sm:$0xf]
    %v257 = vld [vmem:[#allocation9 + $0x44] sm:$0xf]
    %v258 = vld [vmem:[#allocation9 + $0x48] sm:$0xf]
    %v259 = vld [vmem:[#allocation9 + $0x4c] sm:$0xf]
    %v260 = vld [vmem:[#allocation9 + $0x50] sm:$0xf]
    %v261 = vld [vmem:[#allocation9 + $0x54] sm:$0xf]
    %v262 = vld [vmem:[#allocation9 + $0x58] sm:$0xf]
    %v263 = vld [vmem:[#allocation9 + $0x5c] sm:$0xf]
    %v264 = vld [vmem:[#allocation9 + $0x60] sm:$0xf]
    %v265 = vld [vmem:[#allocation9 + $0x64] sm:$0xf]
    %v266 = vld [vmem:[#allocation9 + $0x68] sm:$0xf]
    %v267 = vld [vmem:[#allocation9 + $0x6c] sm:$0xf]
    %v268 = vld [vmem:[#allocation9 + $0x70] sm:$0xf]
    %v269 = vld [vmem:[#allocation9 + $0x74] sm:$0xf]
    %v270 = vld [vmem:[#allocation9 + $0x78] sm:$0xf]
    %v271 = vld [vmem:[#allocation9 + $0x7c] sm:$0xf]
    %v272 = vld [vmem:[%s4] sm:$0x1]
    %v274 = vperm.slane %v272, 0
    %v308 = vunpack.c.l.b16 %v240
    %v309 = vunpack.c.l.b16 %v241
    %v310 = vunpack.c.l.b16 %v242
    %v311 = vunpack.c.l.b16 %v243
    %v312 = vunpack.c.l.b16 %v244
    %v313 = vunpack.c.l.b16 %v245
    %v314 = vunpack.c.l.b16 %v246
    %v315 = vunpack.c.l.b16 %v247
    %v316 = vunpack.c.l.b16 %v248
    %v317 = vunpack.c.l.b16 %v249
    %v318 = vunpack.c.l.b16 %v250
    %v319 = vunpack.c.l.b16 %v251
    %v320 = vunpack.c.l.b16 %v252
    %v321 = vunpack.c.l.b16 %v253
    %v322 = vunpack.c.l.b16 %v254
    %v323 = vunpack.c.l.b16 %v255
    %v324 = vunpack.c.l.b16 %v256
    %v325 = vunpack.c.l.b16 %v257
    %v326 = vunpack.c.l.b16 %v258
    %v327 = vunpack.c.l.b16 %v259
    %v328 = vunpack.c.l.b16 %v260
    %v329 = vunpack.c.l.b16 %v261
    %v330 = vunpack.c.l.b16 %v262
    %v331 = vunpack.c.l.b16 %v263
    %v332 = vunpack.c.l.b16 %v264
    %v333 = vunpack.c.l.b16 %v265
    %v334 = vunpack.c.l.b16 %v266
    %v335 = vunpack.c.l.b16 %v267
    %v336 = vunpack.c.l.b16 %v268
    %v337 = vunpack.c.l.b16 %v269
    %v338 = vunpack.c.l.b16 %v270
    %v339 = vunpack.c.l.b16 %v271
    %v340 = vpack.c.b16 %v309, %v308
    %v341 = vpack.c.b16 %v311, %v310
    %v342 = vpack.c.b16 %v313, %v312
    %v343 = vpack.c.b16 %v315, %v314
    %v344 = vpack.c.b16 %v317, %v316
    %v345 = vpack.c.b16 %v319, %v318
    %v346 = vpack.c.b16 %v321, %v320
    %v347 = vpack.c.b16 %v323, %v322
    %v348 = vpack.c.b16 %v325, %v324
    %v349 = vpack.c.b16 %v327, %v326
    %v350 = vpack.c.b16 %v329, %v328
    %v351 = vpack.c.b16 %v331, %v330
    %v352 = vpack.c.b16 %v333, %v332
    %v353 = vpack.c.b16 %v335, %v334
    %v354 = vpack.c.b16 %v337, %v336
    %v355 = vpack.c.b16 %v339, %v338
    %372 = vmatpush.bf16.msra.mxu0 %v347
    %373 = vmatpush.bf16.msra.mxu0 %v346
    %374 = vmatpush.bf16.msra.mxu0 %v345
    %375 = vmatpush.bf16.msra.mxu0 %v344
    %376 = vmatpush.bf16.msra.mxu0 %v343
    %377 = vmatpush.bf16.msra.mxu0 %v342
    %378 = vmatpush.bf16.msra.mxu0 %v341
    %379 = vmatpush.bf16.msra.mxu0 %v340
    %380 = vmatmul.bf16.gmra.mxu0 %v238
    %v381 = vpop.f32.mrf.mxu0
    %v382 = vadd.f32 %v274, %v381
    %v383 = vpop.f32.mrf.mxu0
    %v384 = vadd.f32 %v274, %v383
    %385 = vdwg.mxu0
    %386 = vmatpush.bf16.msra.mxu0 %v355
    %387 = vmatpush.bf16.msra.mxu0 %v354
    %388 = vmatpush.bf16.msra.mxu0 %v353
    %389 = vmatpush.bf16.msra.mxu0 %v352
    %390 = vmatpush.bf16.msra.mxu0 %v351
    %391 = vmatpush.bf16.msra.mxu0 %v350
    %392 = vmatpush.bf16.msra.mxu0 %v349
    %393 = vmatpush.bf16.msra.mxu0 %v348
    %394 = vmatmul.bf16.gmra.mxu0 %v239
    %v395 = vpop.f32.mrf.mxu0
    %v396 = vadd.f32 %v382, %v395
    %v397 = vpop.f32.mrf.mxu0
    %v398 = vadd.f32 %v384, %v397
    %399 = vdwg.mxu0
    %400 = vmax.xlane.f32.xlu0 %v396
    %v401 = vpop.xlane.xlu0 %400
    %402 = vmax.xlane.f32.xlu0 %v398
    %v403 = vpop.xlane.xlu0 %402
    %v404 = vsub.f32 %v396, %v401
    %v405 = vsub.f32 %v398, %v403
    %v406 = vmul.f32 %v404, 1.442695
    %v407 = vpow.pop %v406
    %v408 = vmul.f32 %v405, 1.442695
    %v409 = vpow.pop %v408
    %v410 = vld [vmem:[#allocation10] sm:$0xff]
    %v411 = vld [vmem:[#allocation10 + $0x8] sm:$0xff]
    %v412 = vld [vmem:[#allocation10 + $0x10] sm:$0xff]
    %v413 = vld [vmem:[#allocation10 + $0x18] sm:$0xff]
    %v414 = vld [vmem:[#allocation10 + $0x20] sm:$0xff]
    %v415 = vld [vmem:[#allocation10 + $0x28] sm:$0xff]
    %v416 = vld [vmem:[#allocation10 + $0x30] sm:$0xff]
    %v417 = vld [vmem:[#allocation10 + $0x38] sm:$0xff]
    %v418 = vld [vmem:[#allocation10 + $0x40] sm:$0xff]
    %v419 = vld [vmem:[#allocation10 + $0x48] sm:$0xff]
    %v420 = vld [vmem:[#allocation10 + $0x50] sm:$0xff]
    %v421 = vld [vmem:[#allocation10 + $0x58] sm:$0xff]
    %v422 = vld [vmem:[#allocation10 + $0x60] sm:$0xff]
    %v423 = vld [vmem:[#allocation10 + $0x68] sm:$0xff]
    %v424 = vld [vmem:[#allocation10 + $0x70] sm:$0xff]
    %v425 = vld [vmem:[#allocation10 + $0x78] sm:$0xff]
    %426 = vmatpush.msra.mxu0 %v425
    %427 = vmatpush.msra.mxu0 %v424
    %428 = vmatpush.msra.mxu0 %v423
    %429 = vmatpush.msra.mxu0 %v422
    %430 = vmatpush.msra.mxu0 %v421
    %431 = vmatpush.msra.mxu0 %v420
    %432 = vmatpush.msra.mxu0 %v419
    %433 = vmatpush.msra.mxu0 %v418
    %434 = vmatpush.msra.mxu0 %v417
    %435 = vmatpush.msra.mxu0 %v416
    %436 = vmatpush.msra.mxu0 %v415
    %437 = vmatpush.msra.mxu0 %v414
    %438 = vmatpush.msra.mxu0 %v413
    %439 = vmatpush.msra.mxu0 %v412
    %440 = vmatpush.msra.mxu0 %v411
    %441 = vmatpush.msra.mxu0 %v410
    %442 = vmatmul.f32.gmra.mxu0 %v407
    %v443 = vpop.f32.mrf.mxu0
    %v444 = vadd.f32 0.0, %v443
    %445 = vmatmul.f32.gmra.mxu0 %v409
    %v446 = vpop.f32.mrf.mxu0
    %v447 = vadd.f32 0.0, %v446
    %448 = vdwg.mxu0
    %v449 = vrcp.pop %v444
    %v450 = vrcp.pop %v447
    %453 = vrot.lane.b32.xlu0 %v449, 127
    %v454 = vpop.permute.xlu0 %453
    %455 = vrot.lane.b32.xlu0 %v450, 127
    %v456 = vpop.permute.xlu0 %455
    %v459 = vmul.f32 %v444, %v454
    %v460 = vmul.f32 %v447, %v456
    %v461 = vld [vmem:[#allocation2] sm:$0x3]
    %v462 = vunpack.c.l.bf16 %v96
    %v463 = vunpack.c.l.bf16 %v97
    %465 = vset.pattern.permute.xlu0 0
    %466 = vperm.xlu0 %465, %v459
    %v467 = vpop.permute.xlu0 %466
    %470 = vset.pattern.permute.xlu0 0
    %471 = vperm.xlu0 %470, %v460
    %v472 = vpop.permute.xlu0 %471
    %v474 = vmul.f32 %v467, %v462
    %v475 = vmul.f32 %v472, %v463
    %v476 = vrot.slane %v474, 4
    %v477 = vadd.f32 %v474, %v476
    %v478 = vrot.slane %v477, 2
    %v479 = vadd.f32 %v477, %v478
    %v480 = vrot.slane %v479, 1
    %v481 = vadd.f32 %v479, %v480
    %v482 = vrot.slane %v475, 4
    %v483 = vadd.f32 %v475, %v482
    %v484 = vrot.slane %v483, 2
    %v485 = vadd.f32 %v483, %v484
    %v486 = vrot.slane %v485, 1
    %v487 = vadd.f32 %v485, %v486
    %vm490 = vcmask 1041409
    %v491 = vsel %vm490, %v487, %v481
    %v493 = vadd.f32 %v461, %v491
    %494 = vst [vmem:[#allocation2] sm:$0x3] %v493
    // Predicated region
    $region50: #{tpu_custom_call.1} parent=1 // pred_check
      %p495 = pneg %p91
    $region51: #{tpu_custom_call.1} parent=1 // pred_check_branch
      %497 = sbr.rel (%p495) target = $region53
    $region52: #{tpu_custom_call.1} parent=1 // pred_region
      %v498 = vld [vmem:[#allocation2] sm:$0x3]
      %s499 = sld [smem:[#allocation3]]
      %v500 = vstv %s499
      %v501 = vadd.f32 %v498, %v500
      %vm502 = vcmp.gt.f32.partialorder %v501, 0.0
      %v503 = vmul.f32 %v501, 0.01
      %v504 = vsel %vm502, %v501, %v503
      %505 = vst [vmem:[#allocation12] sm:$0x3] %v504
    $region53: #{tpu_custom_call.1} parent=1 // pred_fallthru
      _
    // Predicated region
    $region54: #{tpu_custom_call.1} parent=1 // pred_check
      _
    $region55: #{tpu_custom_call.1} parent=1 // pred_check_branch
      %507 = sbr.rel (0) target = $region57
    $region56: #{tpu_custom_call.1} parent=1 // pred_region
      %509 = vsyncadd [#allocation6], 0
      %s511 = sshll.u32 [#allocation12], 4
      %s512 = int_to_ptr.vmem [resolvable:$true] %s511
      %s513 = sshll.u32 %s7, 4
      %s514 = int_to_ptr.hbm [resolvable:$true] %s513
      %516 = dma.vmem_to_hbm [thread:$0]  %s512, 32, %s514, [#allocation6]
    $region57: #{tpu_custom_call.1} parent=1 // pred_fallthru
      _
    // Predicated region
    $region58: #{tpu_custom_call.1} parent=1 // pred_check
      _
    $region59: #{tpu_custom_call.1} parent=1 // pred_check_branch
      %518 = sbr.rel (0) target = $region61
    $region60: #{tpu_custom_call.1} parent=1 // pred_region
      %520 = dma.done [#allocation6], 32
    $region61: #{tpu_custom_call.1} parent=1 // pred_fallthru
      _
    %521 = vsyncpa [#allocation5], 1
    %522 = vsyncpa [#allocation8], 1
    %523 = vsyncpa [#allocation11], 1
    %524 = vsyncpa [#allocation6], 1

</llo_original>
